<compile_context>
chip_gen: v7x
topology: tpu7x:2x2x1
jax: 0.10.0
libtpu: 0.0.40
codegen_flags: <defaults>
</compile_context>

<pallas_src>
import functools
import math

import jax
import jax.numpy as jnp
from jax.experimental import pallas as pl
from jax.experimental.pallas import tpu as pltpu

IGNORE_LABEL = 21
THRESH = 0.6
MIN_KEPT = 0  # module default
# TODO(synk): min_kept > 0 requires a global argsort of the kept-class probs to
#             raise the threshold; not implemented (default min_kept=0 path only).

# Deterministic class-balance weights from the module's __init__ (19 classes).
CLASS_WEIGHT = jnp.array(
    [0.8373, 0.918, 0.866, 1.0345, 1.0166, 0.9969, 0.9754, 1.0489, 0.8786,
     1.0023, 0.9539, 0.9843, 1.1116, 0.9037, 1.0865, 1.0955, 1.0865, 1.1529,
     1.0507], dtype=jnp.float32)


def _ohem_ce_kernel(logits_ref, labels_ref, weight_ref, out_ref,
                    acc_num, acc_den, *, ignore_label, log_thresh):
    i = pl.program_id(1)

    @pl.when(i == 0)
    def _():
        acc_num[...] = jnp.zeros_like(acc_num)
        acc_den[...] = jnp.zeros_like(acc_den)

    x = logits_ref[...].astype(jnp.float32)      # (C, TP): classes on sublanes, pixels on lanes
    lbl = labels_ref[...]                        # (1, TP) int32
    wvec = weight_ref[...].astype(jnp.float32)   # (C, 1)

    # log-softmax pieces over the class (sublane) axis.
    m = jnp.max(x, axis=0, keepdims=True)                        # (1, TP)
    z = x - m                                                    # (C, TP)
    lse = jnp.log(jnp.sum(jnp.exp(z), axis=0, keepdims=True))    # (1, TP)

    # one-hot gather of the true-class (centered) logit and class weight.
    cls = jax.lax.broadcasted_iota(jnp.int32, x.shape, 0)        # (C, TP)
    onehot = cls == lbl                                          # all-False when ignored
    true_z = jnp.sum(jnp.where(onehot, z, 0.0), axis=0, keepdims=True)     # (1, TP)
    w_lbl = jnp.sum(jnp.where(onehot, wvec, 0.0), axis=0, keepdims=True)   # (1, TP)

    true_logp = true_z - lse                                     # (1, TP)
    valid = lbl != ignore_label
    kept = jnp.logical_and(valid, true_logp <= log_thresh)       # OHEM selection (log space)

    acc_num[...] += jnp.where(kept, -w_lbl * true_logp, 0.0)
    acc_den[...] += jnp.where(kept, w_lbl, 0.0)

    # Epilogue: one cross-lane reduction + one lane-dense store per batch chunk.
    @pl.when(i == pl.num_programs(1) - 1)
    def _():
        num_s = jnp.sum(acc_num[...], axis=1, keepdims=True)     # (1, 1)
        den_s = jnp.sum(acc_den[...], axis=1, keepdims=True)     # (1, 1)
        lane = jax.lax.broadcasted_iota(jnp.int32, out_ref.shape, 1)
        out_ref[...] = jnp.where(lane == 0, num_s,
                                 jnp.where(lane == 1, den_s, 0.0))


def ohem_cross_entropy_2d(predict, target, *, ignore_label=IGNORE_LABEL,
                          thresh=THRESH, class_weight=CLASS_WEIGHT,
                          tile_p=8192):
    """predict: (n, c, h, w) float; target: (n, h, w) int. Returns scalar loss."""
    n, c, h, w = predict.shape
    assert target.shape == (n, h, w)
    hw = h * w

    # Pixels go on the 128-lane axis; clamp the tile so tiny inputs don't over-pad.
    tile_p = min(tile_p, pl.cdiv(hw, 128) * 128)
    hw_pad = pl.cdiv(hw, tile_p) * tile_p
    num_tiles = hw_pad // tile_p

    logits = predict.reshape(n, c, hw)                   # free reshape (no NCHW->NHWC transpose)
    labels = target.reshape(n, 1, hw).astype(jnp.int32)  # lane-dense labels
    if hw_pad != hw:
        logits = jnp.pad(logits, ((0, 0), (0, 0), (0, hw_pad - hw)))
        labels = jnp.pad(labels, ((0, 0), (0, 0), (0, hw_pad - hw)),
                         constant_values=ignore_label)   # padded pixels contribute nothing
    weight = class_weight.reshape(c, 1).astype(jnp.float32)

    kernel = functools.partial(_ohem_ce_kernel, ignore_label=ignore_label,
                               log_thresh=float(math.log(thresh)))

    out = pl.pallas_call(
        kernel,
        out_shape=jax.ShapeDtypeStruct((n, 1, 128), jnp.float32),
        grid_spec=pltpu.PrefetchScalarGridSpec(
            num_scalar_prefetch=0,
            grid=(n, num_tiles),
            in_specs=[
                # logits tile: classes on sublanes, pixels on lanes
                pl.BlockSpec((None, c, tile_p), lambda b, i: (b, 0, i)),
                # labels tile: lane-dense int32
                pl.BlockSpec((None, 1, tile_p), lambda b, i: (b, 0, i)),
                # class-balance weights (broadcast to every tile)
                pl.BlockSpec((c, 1), lambda b, i: (0, 0)),
            ],
            out_specs=pl.BlockSpec((None, 1, 128), lambda b, i: (b, 0, 0)),
            scratch_shapes=[pltpu.VMEM((1, tile_p), jnp.float32),   # weighted-NLL accumulator
                            pltpu.VMEM((1, tile_p), jnp.float32)],  # weight-sum accumulator
        ),
        compiler_params=pltpu.CompilerParams(
            dimension_semantics=("parallel", "arbitrary")),   # batch axis uses both v7x TCs
    )(logits, labels, weight)

    num = jnp.sum(out[:, 0, 0])
    den = jnp.sum(out[:, 0, 1])
    # NOTE: if no pixel is kept this is 0/0 = NaN, matching PyTorch's weighted
    # CrossEntropyLoss behaviour when every target is ignored.
    return (num / den).astype(predict.dtype)


def _reference(predict, target):
    """Pure-JAX reference of the same forward (for sanity check)."""
    n, c, h, w = predict.shape
    logits = jnp.transpose(predict, (0, 2, 3, 1)).reshape(-1, c).astype(jnp.float32)
    labels = target.reshape(-1).astype(jnp.int32)
    logsm = jax.nn.log_softmax(logits, axis=-1)
    valid = labels != IGNORE_LABEL
    safe_lbl = jnp.where(valid, labels, 0)
    true_logp = jnp.take_along_axis(logsm, safe_lbl[:, None], axis=1)[:, 0]
    true_prob = jnp.exp(true_logp)
    kept = valid & (true_prob <= THRESH)
    w_lbl = CLASS_WEIGHT[safe_lbl]
    num = jnp.sum(jnp.where(kept, -w_lbl * true_logp, 0.0))
    den = jnp.sum(jnp.where(kept, w_lbl, 0.0))
    return num / den


if __name__ == "__main__":
    key = jax.random.PRNGKey(0)
    k1, k2 = jax.random.split(key)

    n, c, h, w = 2, 19, 16, 16   # 19 classes to match the class-balance weights
    predict = jax.random.normal(k1, (n, c, h, w), dtype=jnp.float32)
    raw = jax.random.randint(k2, (n, h, w), 0, 20, dtype=jnp.int32)
    target = jnp.where(raw == 19, IGNORE_LABEL, raw)   # labels in {0..18} ∪ {21}

    loss = jax.block_until_ready(ohem_cross_entropy_2d(predict, target))
    ref = jax.block_until_ready(_reference(predict, target))
    assert jnp.allclose(loss, ref, rtol=1e-5, atol=1e-5), (loss, ref)
    print("KERNEL_OK")
</pallas_src>

<mosaic_0001>
module attributes {stable_mosaic.version = 11 : i64} {
  func.func @_ohem_ce_kernel(%arg0: i32, %arg1: i32, %arg2: memref<1x19x256xf32, #tpu.memory_space<vmem>>, %arg3: memref<1x1x256xi32, #tpu.memory_space<vmem>>, %arg4: memref<19x1xf32, #tpu.memory_space<vmem>>, %arg5: memref<1x1x128xf32, #tpu.memory_space<vmem>>, %arg6: memref<1x256xf32, #tpu.memory_space<vmem>>, %arg7: memref<1x256xf32, #tpu.memory_space<vmem>>) attributes {dimension_semantics = [#tpu.dimension_semantics<parallel>, #tpu.dimension_semantics<arbitrary>], iteration_bounds = array<i64: 2, 1>, scalar_prefetch = 0 : i64, scratch_operands = 2 : i64, tpu.core_type = #tpu.core_type<tc>, window_params = [{transform_indices = @transform_0, window_bounds = array<i64: 1, 19, 256>}, {transform_indices = @transform_1, window_bounds = array<i64: 1, 1, 256>}, {pipeline_mode = #tpu.pipeline_mode<synchronous>, transform_indices = @transform_2, window_bounds = array<i64: 19, 1>}, {transform_indices = @transform_3, window_bounds = array<i64: 1, 1, 128>}]} {
    %c0_i32 = arith.constant 0 : i32
    %0 = arith.cmpi eq, %arg1, %c0_i32 : i32
    %1 = arith.extui %0 : i1 to i32
    %c0_i32_0 = arith.constant 0 : i32
    %2 = arith.cmpi ne, %1, %c0_i32_0 : i32
    scf.if %2 {
      %cst_27 = arith.constant 0.000000e+00 : f32
      %51 = vector.broadcast %cst_27 : f32 to vector<1x256xf32>
      %c0_28 = arith.constant 0 : index
      %c0_29 = arith.constant 0 : index
      %52 = vector.load %arg6[%c0_28, %c0_29] : memref<1x256xf32, #tpu.memory_space<vmem>>, vector<1x256xf32>
      tpu.vector_store %arg6[%c0_28, %c0_29], %51 {strides = array<i32>} : memref<1x256xf32, #tpu.memory_space<vmem>>, vector<1x256xf32>,
      %cst_30 = arith.constant 0.000000e+00 : f32
      %53 = vector.broadcast %cst_30 : f32 to vector<1x256xf32>
      %c0_31 = arith.constant 0 : index
      %c0_32 = arith.constant 0 : index
      %54 = vector.load %arg7[%c0_31, %c0_32] : memref<1x256xf32, #tpu.memory_space<vmem>>, vector<1x256xf32>
      tpu.vector_store %arg7[%c0_31, %c0_32], %53 {strides = array<i32>} : memref<1x256xf32, #tpu.memory_space<vmem>>, vector<1x256xf32>,
    } else {
    }
    %c0 = arith.constant 0 : index
    %c0_1 = arith.constant 0 : index
    %c0_2 = arith.constant 0 : index
    %3 = vector.load %arg2[%c0, %c0_1, %c0_2] : memref<1x19x256xf32, #tpu.memory_space<vmem>>, vector<1x19x256xf32>
    %4 = vector.shape_cast %3 : vector<1x19x256xf32> to vector<19x256xf32>
    %c0_3 = arith.constant 0 : index
    %c0_4 = arith.constant 0 : index
    %c0_5 = arith.constant 0 : index
    %5 = vector.load %arg3[%c0_3, %c0_4, %c0_5] : memref<1x1x256xi32, #tpu.memory_space<vmem>>, vector<1x1x256xi32>
    %6 = vector.shape_cast %5 : vector<1x1x256xi32> to vector<1x256xi32>
    %c0_6 = arith.constant 0 : index
    %c0_7 = arith.constant 0 : index
    %7 = vector.load %arg4[%c0_6, %c0_7] : memref<19x1xf32, #tpu.memory_space<vmem>>, vector<19x1xf32>
    %cst = arith.constant dense<0xFF800000> : vector<256xf32>
    %8 = vector.multi_reduction <maximumf>, %4, %cst [0] : vector<19x256xf32> to vector<256xf32>
    %9 = vector.shape_cast %8 : vector<256xf32> to vector<1x256xf32>
    %10 = vector.broadcast %9 : vector<1x256xf32> to vector<19x256xf32>
    %11 = arith.subf %4, %10 : vector<19x256xf32>
    %12 = math.exp %11 : vector<19x256xf32>
    %cst_8 = arith.constant dense<0.000000e+00> : vector<256xf32>
    %13 = vector.multi_reduction <add>, %12, %cst_8 [0] : vector<19x256xf32> to vector<256xf32>
    %14 = vector.shape_cast %13 : vector<256xf32> to vector<1x256xf32>
    %15 = math.log %14 : vector<1x256xf32>
    %16 = tpu.iota {dimensions = array<i32: 0>} : vector<19x256xi32>
    %17 = vector.broadcast %6 : vector<1x256xi32> to vector<19x256xi32>
    %18 = arith.cmpi eq, %16, %17 : vector<19x256xi32>
    %cst_9 = arith.constant 0.000000e+00 : f32
    %19 = vector.broadcast %cst_9 : f32 to vector<19x256xf32>
    %20 = arith.select %18, %11, %19 : vector<19x256xi1>, vector<19x256xf32>
    %cst_10 = arith.constant dense<0.000000e+00> : vector<256xf32>
    %21 = vector.multi_reduction <add>, %20, %cst_10 [0] : vector<19x256xf32> to vector<256xf32>
    %22 = vector.shape_cast %21 : vector<256xf32> to vector<1x256xf32>
    %cst_11 = arith.constant 0.000000e+00 : f32
    %23 = vector.shape_cast %7 : vector<19x1xf32> to vector<19x1xf32>
    %24 = vector.broadcast %23 : vector<19x1xf32> to vector<19x256xf32>
    %25 = vector.broadcast %cst_11 : f32 to vector<19x256xf32>
    %26 = arith.select %18, %24, %25 : vector<19x256xi1>, vector<19x256xf32>
    %cst_12 = arith.constant dense<0.000000e+00> : vector<256xf32>
    %27 = vector.multi_reduction <add>, %26, %cst_12 [0] : vector<19x256xf32> to vector<256xf32>
    %28 = vector.shape_cast %27 : vector<256xf32> to vector<1x256xf32>
    %29 = arith.subf %22, %15 : vector<1x256xf32>
    %c21_i32 = arith.constant 21 : i32
    %30 = vector.broadcast %c21_i32 : i32 to vector<1x256xi32>
    %31 = arith.cmpi ne, %6, %30 : vector<1x256xi32>
    %cst_13 = arith.constant -0.510825634 : f32
    %32 = vector.broadcast %cst_13 : f32 to vector<1x256xf32>
    %33 = arith.cmpf ole, %29, %32 : vector<1x256xf32>
    %34 = arith.andi %31, %33 : vector<1x256xi1>
    %c0_14 = arith.constant 0 : index
    %c0_15 = arith.constant 0 : index
    %35 = vector.load %arg6[%c0_14, %c0_15] : memref<1x256xf32, #tpu.memory_space<vmem>>, vector<1x256xf32>
    %cst_16 = arith.constant 0.000000e+00 : f32
    %36 = vector.broadcast %cst_16 : f32 to vector<1x256xf32>
    %37 = arith.subf %36, %28 : vector<1x256xf32>
    %38 = arith.mulf %37, %29 : vector<1x256xf32>
    %cst_17 = arith.constant 0.000000e+00 : f32
    %39 = vector.broadcast %cst_17 : f32 to vector<1x256xf32>
    %40 = arith.select %34, %38, %39 : vector<1x256xi1>, vector<1x256xf32>
    %41 = arith.addf %35, %40 : vector<1x256xf32>
    %c0_18 = arith.constant 0 : index
    %c0_19 = arith.constant 0 : index
    %42 = vector.load %arg6[%c0_18, %c0_19] : memref<1x256xf32, #tpu.memory_space<vmem>>, vector<1x256xf32>
    tpu.vector_store %arg6[%c0_18, %c0_19], %41 {strides = array<i32>} : memref<1x256xf32, #tpu.memory_space<vmem>>, vector<1x256xf32>,
    %c0_20 = arith.constant 0 : index
    %c0_21 = arith.constant 0 : index
    %43 = vector.load %arg7[%c0_20, %c0_21] : memref<1x256xf32, #tpu.memory_space<vmem>>, vector<1x256xf32>
    %cst_22 = arith.constant 0.000000e+00 : f32
    %44 = vector.broadcast %cst_22 : f32 to vector<1x256xf32>
    %45 = arith.select %34, %28, %44 : vector<1x256xi1>, vector<1x256xf32>
    %46 = arith.addf %43, %45 : vector<1x256xf32>
    %c0_23 = arith.constant 0 : index
    %c0_24 = arith.constant 0 : index
    %47 = vector.load %arg7[%c0_23, %c0_24] : memref<1x256xf32, #tpu.memory_space<vmem>>, vector<1x256xf32>
    tpu.vector_store %arg7[%c0_23, %c0_24], %46 {strides = array<i32>} : memref<1x256xf32, #tpu.memory_space<vmem>>, vector<1x256xf32>,
    %c0_i32_25 = arith.constant 0 : i32
    %48 = arith.cmpi eq, %arg1, %c0_i32_25 : i32
    %49 = arith.extui %48 : i1 to i32
    %c0_i32_26 = arith.constant 0 : i32
    %50 = arith.cmpi ne, %49, %c0_i32_26 : i32
    scf.if %50 {
      %c0_27 = arith.constant 0 : index
      %c0_28 = arith.constant 0 : index
      %51 = vector.load %arg6[%c0_27, %c0_28] : memref<1x256xf32, #tpu.memory_space<vmem>>, vector<1x256xf32>
      %cst_29 = arith.constant dense<0.000000e+00> : vector<1xf32>
      %52 = vector.multi_reduction <add>, %51, %cst_29 [1] : vector<1x256xf32> to vector<1xf32>
      %53 = vector.shape_cast %52 : vector<1xf32> to vector<1x1xf32>
      %c0_30 = arith.constant 0 : index
      %c0_31 = arith.constant 0 : index
      %54 = vector.load %arg7[%c0_30, %c0_31] : memref<1x256xf32, #tpu.memory_space<vmem>>, vector<1x256xf32>
      %cst_32 = arith.constant dense<0.000000e+00> : vector<1xf32>
      %55 = vector.multi_reduction <add>, %54, %cst_32 [1] : vector<1x256xf32> to vector<1xf32>
      %56 = vector.shape_cast %55 : vector<1xf32> to vector<1x1xf32>
      %57 = tpu.iota {dimensions = array<i32: 1>} : vector<1x128xi32>
      %c0_i32_33 = arith.constant 0 : i32
      %58 = vector.broadcast %c0_i32_33 : i32 to vector<1x128xi32>
      %59 = arith.cmpi eq, %57, %58 : vector<1x128xi32>
      %c1_i32 = arith.constant 1 : i32
      %60 = vector.broadcast %c1_i32 : i32 to vector<1x128xi32>
      %61 = arith.cmpi eq, %57, %60 : vector<1x128xi32>
      %cst_34 = arith.constant 0.000000e+00 : f32
      %62 = vector.shape_cast %56 : vector<1x1xf32> to vector<1x1xf32>
      %63 = vector.broadcast %62 : vector<1x1xf32> to vector<1x128xf32>
      %64 = vector.broadcast %cst_34 : f32 to vector<1x128xf32>
      %65 = arith.select %61, %63, %64 : vector<1x128xi1>, vector<1x128xf32>
      %66 = vector.shape_cast %53 : vector<1x1xf32> to vector<1x1xf32>
      %67 = vector.broadcast %66 : vector<1x1xf32> to vector<1x128xf32>
      %68 = arith.select %59, %67, %65 : vector<1x128xi1>, vector<1x128xf32>
      %c0_35 = arith.constant 0 : index
      %c0_36 = arith.constant 0 : index
      %c0_37 = arith.constant 0 : index
      %69 = vector.load %arg5[%c0_35, %c0_36, %c0_37] : memref<1x1x128xf32, #tpu.memory_space<vmem>>, vector<1x1x128xf32>
      %70 = vector.shape_cast %69 : vector<1x1x128xf32> to vector<1x128xf32>
      %71 = vector.shape_cast %68 : vector<1x128xf32> to vector<1x1x128xf32>
      tpu.vector_store %arg5[%c0_35, %c0_36, %c0_37], %71 {strides = array<i32>} : memref<1x1x128xf32, #tpu.memory_space<vmem>>, vector<1x1x128xf32>,
    } else {
    }
    return
  }
  func.func @transform_0(%arg0: i32, %arg1: i32) -> (i32, i32, i32) {
    %c0_i32 = arith.constant 0 : i32
    %c0_i32_0 = arith.constant 0 : i32
    return %arg0, %c0_i32, %arg1 : i32, i32, i32
  }
  func.func @transform_1(%arg0: i32, %arg1: i32) -> (i32, i32, i32) {
    %c0_i32 = arith.constant 0 : i32
    %c0_i32_0 = arith.constant 0 : i32
    return %arg0, %c0_i32, %arg1 : i32, i32, i32
  }
  func.func @transform_2(%arg0: i32, %arg1: i32) -> (i32, i32) {
    %c0_i32 = arith.constant 0 : i32
    %c0_i32_0 = arith.constant 0 : i32
    %c0_i32_1 = arith.constant 0 : i32
    return %c0_i32, %c0_i32_0 : i32, i32
  }
  func.func @transform_3(%arg0: i32, %arg1: i32) -> (i32, i32, i32) {
    %c0_i32 = arith.constant 0 : i32
    %c0_i32_0 = arith.constant 0 : i32
    %c0_i32_1 = arith.constant 0 : i32
    return %arg0, %c0_i32, %c0_i32_0 : i32, i32, i32
  }
}

</mosaic_0001>

<llo_original>
// kernel: tpu_custom_call.1
$region0: #{tpu_custom_call.1}
  #allocation0 [shape = 'u32[]', space=smem, size = 0x4, offset = 0x4, fixed_abs, tag = 'smem constant byte address 0x4 - core index']
  #allocation1 [shape = 'u32[144,128]{1,0:T(1,128)}', space=vmem, size = 0x12000, scoped, tag = 'internal scratch']
  #allocation2 [shape = 'f32[1,256]{1,0:T(1,128)}', space=vmem, size = 0x400, scoped, tag = 'scratch operand']
  #allocation3 [shape = 'f32[1,256]{1,0:T(1,128)}', space=vmem, size = 0x400, scoped, tag = 'scratch operand']
  %s0 = inlined_call_operand.vmem [shape: f32[2,19,256], index: 0, kind: input, shape index: {}]
  %s1 = inlined_call_operand.vmem [shape: s32[2,1,256], index: 1, kind: input, shape index: {}]
  %s2 = inlined_call_operand.vmem [shape: f32[19,1], index: 2, kind: input, shape index: {}]
  %s3 = inlined_call_operand.hbm [shape: f32[2,1,128], index: 3, kind: output, shape index: {}]
  %s4 = sld [smem:[#allocation0]]
  $region53: #{tpu_custom_call.1} parent=0
    _
  %s6 = ssub.s32 1, %s4
  %s7 = scalar_select 0, %s6, %s4
  $region1: #{tpu_custom_call.1} parent=0
    #allocation4 [shape = 'u8[1024]{0}', space=vmem, size = 0x400, scoped, tag = 'output window, operand 0']
    #allocation5 [shape = 's32[2]{0}', space=sflag, size = 0x8, scoped, tag = 'scoped memory for tpu_custom_call.1']
    %8 = vsyncpa [#allocation5], 0
    %s9 = scalar_lea.sflag [#allocation5], 1
    %10 = vsyncpa %s9, 0
    loop: start=0, step=1, limit=4
    $region2: #{tpu_custom_call.1} parent=1 // loop_pre_header
      _
    $region3: #{tpu_custom_call.1} parent=1 // loop_header
      %s12 = sphi 0, %s16
      %p13 = scmp.ge.s32.totalorder %s12, 4
      %s19 = sphi 0, %s31
      %s20 = sphi 0, %s27
      %s21 = sphi 0, %s19
      %s22 = sphi 0, %s20
      %s23 = sphi 0, %s21
      %s24 = sphi 0, %s22
      %s36 = sphi 0, %s38
      %s39 = sphi 0, %s36
      %s40 = sphi 0, %s39
      %s56 = sphi 0, %s40
      %s64 = sphi 0, %s66
      %s67 = sphi 0, %s64
      %s68 = sphi 0, %s67
      %s84 = sphi 0, %s68
      %s88 = sphi 0, %s88
      %s90 = sphi 0, %s88
      %s91 = sphi 0, %s90
      %s105 = sphi 0, %s91
      %s111 = sphi 0, %s113
      %s114 = sphi 0, %s111
      %s115 = sphi 0, %s114
      %s131 = sphi 0, %s115
    $region4: #{tpu_custom_call.1} parent=1 // loop_header_branch
      %15 = sbr.rel (%p13) target = $region8
    $region5: #{tpu_custom_call.1} parent=1 // loop_body
      %s17 = ssub.s32 %s12, 1
      %s18 = ssub.s32 %s12, 2
      %s25 = sadd.s32 1, %s20
      %p26 = scmp.ge.s32.totalorder %s25, 1
      %s27 = scalar_select %p26, 0, %s25
      %s28 = sadd.s32 1, %s19
      %s29 = scalar_select %p26, %s28, %s19
      %p30 = scmp.ge.s32.totalorder %s29, 2
      %s31 = scalar_select %p30, 0, %s29
      %s32 = ssub.s32 %s19, %s31
      %s33 = ssub.s32 %s20, %s27
      %s34 = sor.u32 %s32, %s33
      %p35 = scmp.eq.s32.totalorder %s34, 0
      %s37 = sadd.s32 %s36, 1
      %s38 = scalar_select %p35, %s36, %s37
      %p41 = pneg %p35
      %p42 = scmp.eq.s32.totalorder %s12, 1
      %p43 = por %p41, %p42
      %p44 = scmp.ne.s32.totalorder %s36, %s39
      %p45 = scmp.eq.s32.totalorder %s12, 0
      %p46 = por %p44, %p45
      %p47 = scmp.ne.s32.totalorder %s36, %s39
      %p48 = scmp.eq.s32.totalorder %s17, 1
      %p49 = por %p47, %p48
      %p50 = scmp.ne.s32.totalorder %s39, %s40
      %p51 = scmp.eq.s32.totalorder %s17, 0
      %p52 = por %p50, %p51
      %p53 = scmp.ne.s32.totalorder %s39, %s40
      %p54 = scmp.eq.s32.totalorder %s18, 1
      %p55 = por %p53, %p54
      %p57 = scmp.ne.s32.totalorder %s40, %s56
      %p58 = scmp.eq.s32.totalorder %s18, 0
      %p59 = por %p57, %p58
      %s60 = ssub.s32 %s19, %s31
      %s61 = ssub.s32 %s20, %s27
      %s62 = sor.u32 %s60, %s61
      %p63 = scmp.eq.s32.totalorder %s62, 0
      %s65 = sadd.s32 %s64, 1
      %s66 = scalar_select %p63, %s64, %s65
      %p69 = pneg %p63
      %p70 = scmp.eq.s32.totalorder %s12, 1
      %p71 = por %p69, %p70
      %p72 = scmp.ne.s32.totalorder %s64, %s67
      %p73 = scmp.eq.s32.totalorder %s12, 0
      %p74 = por %p72, %p73
      %p75 = scmp.ne.s32.totalorder %s64, %s67
      %p76 = scmp.eq.s32.totalorder %s17, 1
      %p77 = por %p75, %p76
      %p78 = scmp.ne.s32.totalorder %s67, %s68
      %p79 = scmp.eq.s32.totalorder %s17, 0
      %p80 = por %p78, %p79
      %p81 = scmp.ne.s32.totalorder %s67, %s68
      %p82 = scmp.eq.s32.totalorder %s18, 1
      %p83 = por %p81, %p82
      %p85 = scmp.ne.s32.totalorder %s68, %s84
      %p86 = scmp.eq.s32.totalorder %s18, 0
      %p87 = por %p85, %p86
      %s89 = sadd.s32 %s88, 1
      %p92 = scmp.eq.s32.totalorder %s12, 1
      %p93 = scmp.ne.s32.totalorder %s88, %s90
      %p94 = scmp.eq.s32.totalorder %s12, 0
      %p95 = por %p93, %p94
      %p96 = scmp.ne.s32.totalorder %s88, %s90
      %p97 = scmp.eq.s32.totalorder %s17, 1
      %p98 = por %p96, %p97
      %p99 = scmp.ne.s32.totalorder %s90, %s91
      %p100 = scmp.eq.s32.totalorder %s17, 0
      %p101 = por %p99, %p100
      %p102 = scmp.ne.s32.totalorder %s90, %s91
      %p103 = scmp.eq.s32.totalorder %s18, 1
      %p104 = por %p102, %p103
      %p106 = scmp.ne.s32.totalorder %s91, %s105
      %p107 = scmp.eq.s32.totalorder %s18, 0
      %p108 = por %p106, %p107
      %s109 = ssub.s32 %s19, %s31
      %p110 = scmp.eq.s32.totalorder %s109, 0
      %s112 = sadd.s32 %s111, 1
      %s113 = scalar_select %p110, %s111, %s112
      %p116 = pneg %p110
      %p117 = scmp.eq.s32.totalorder %s12, 1
      %p118 = por %p116, %p117
      %p119 = scmp.ne.s32.totalorder %s111, %s114
      %p120 = scmp.eq.s32.totalorder %s12, 0
      %p121 = por %p119, %p120
      %p122 = scmp.ne.s32.totalorder %s111, %s114
      %p123 = scmp.eq.s32.totalorder %s17, 1
      %p124 = por %p122, %p123
      %p125 = scmp.ne.s32.totalorder %s114, %s115
      %p126 = scmp.eq.s32.totalorder %s17, 0
      %p127 = por %p125, %p126
      %p128 = scmp.ne.s32.totalorder %s114, %s115
      %p129 = scmp.eq.s32.totalorder %s18, 1
      %p130 = por %p128, %p129
      %p132 = scmp.ne.s32.totalorder %s115, %s131
      %p133 = scmp.eq.s32.totalorder %s18, 0
      %p134 = por %p132, %p133
      %p135 = scmp.le.s32.totalorder 1, %s12
      %p136 = scmp.lt.s32.totalorder %s12, 3
      %p137 = pnand %p135, %p136
      %p138 = pneg %p137
      // Predicated region
      $region9: #{tpu_custom_call.1} parent=5 // pred_check
        _
      $region10: #{tpu_custom_call.1} parent=5 // pred_check_branch
        %140 = sbr.rel (%p137) target = $region12
      $region11: #{tpu_custom_call.1} parent=5 // pred_region
        %s141 = ssub.s32 %s12, 1
        // Predicated region
        $region13: #{tpu_custom_call.1} parent=11 // pred_check
          %p142 = pneg %p101
        $region14: #{tpu_custom_call.1} parent=11 // pred_check_branch
          %144 = sbr.rel (%p142) target = $region16
        $region15: #{tpu_custom_call.1} parent=11 // pred_region
          _
        $region16: #{tpu_custom_call.1} parent=11 // pred_fallthru
          _
      $region12: #{tpu_custom_call.1} parent=5 // pred_fallthru
        _
      %p145 = scmp.lt.s32.totalorder %s12, 2
      // Predicated region
      $region17: #{tpu_custom_call.1} parent=5 // pred_check
        %p146 = pneg %p145
      $region18: #{tpu_custom_call.1} parent=5 // pred_check_branch
        %148 = sbr.rel (%p146) target = $region20
      $region19: #{tpu_custom_call.1} parent=5 // pred_region
        // Predicated region
        $region21: #{tpu_custom_call.1} parent=19 // pred_check
          %p149 = pneg %p46
        $region22: #{tpu_custom_call.1} parent=19 // pred_check_branch
          %151 = sbr.rel (%p149) target = $region24
        $region23: #{tpu_custom_call.1} parent=19 // pred_region
          %s152 = smul.u32 2, %s20
          %p153 = scmp.lt.s32.totalorder %s19, 1
          %s154 = scalar_select %p153, %s19, 1
          %p155 = scmp.lt.s32.totalorder %s152, 1
          %s156 = scalar_select %p155, %s152, 1
          %s157 = smul.addr %s154, 6
          %s158 = sadd.s32 %s156, %s157
          %s159 = smul.addr %s158, 8
          %s160 = scalar_lea.vmem %s0, %s159
          %s161 = smul.u32 2, %s20
        $region24: #{tpu_custom_call.1} parent=19 // pred_fallthru
          _
        // Predicated region
        $region25: #{tpu_custom_call.1} parent=19 // pred_check
          %p162 = pneg %p74
        $region26: #{tpu_custom_call.1} parent=19 // pred_check_branch
          %164 = sbr.rel (%p162) target = $region28
        $region27: #{tpu_custom_call.1} parent=19 // pred_region
          %s165 = smul.u32 2, %s20
          %p166 = scmp.lt.s32.totalorder %s19, 1
          %s167 = scalar_select %p166, %s19, 1
          %p168 = scmp.lt.s32.totalorder %s165, 1
          %s169 = scalar_select %p168, %s165, 1
          %s170 = smul.addr %s167, 2
          %s171 = sadd.s32 %s169, %s170
          %s172 = scalar_lea.vmem %s1, %s171
          %s173 = smul.u32 2, %s20
        $region28: #{tpu_custom_call.1} parent=19 // pred_fallthru
          _
      $region20: #{tpu_custom_call.1} parent=5 // pred_fallthru
        _
      %p174 = scmp.le.s32.totalorder 1, %s12
      %p175 = scmp.lt.s32.totalorder %s12, 3
      %p176 = pnand %p174, %p175
      %p177 = pneg %p176
      // Predicated region
      $region29: #{tpu_custom_call.1} parent=5 // pred_check
        _
      $region30: #{tpu_custom_call.1} parent=5 // pred_check_branch
        %179 = sbr.rel (%p176) target = $region32
      $region31: #{tpu_custom_call.1} parent=5 // pred_region
        %s180 = ssub.s32 %s12, 1
        %s181 = smul.u32 2, %s22
        %p182 = scmp.lt.s32.totalorder %s21, 1
        %s183 = scalar_select %p182, %s21, 1
        %p184 = scmp.lt.s32.totalorder %s181, 1
        %s185 = scalar_select %p184, %s181, 1
        %s186 = smul.addr %s183, 6
        %s187 = sadd.s32 %s185, %s186
        %s188 = smul.addr %s187, 8
        %s189 = scalar_lea.vmem %s0, %s188
        %p190 = pneg %p52
        %p191 = pneg %p49
        %s192 = smul.u32 2, %s22
        %p193 = scmp.lt.s32.totalorder %s21, 1
        %s194 = scalar_select %p193, %s21, 1
        %p195 = scmp.lt.s32.totalorder %s192, 1
        %s196 = scalar_select %p195, %s192, 1
        %s197 = smul.addr %s194, 2
        %s198 = sadd.s32 %s196, %s197
        %s199 = scalar_lea.vmem %s1, %s198
        %p200 = pneg %p80
        %p201 = pneg %p77
        %p202 = pneg %p101
        %p203 = pneg %p98
        %p204 = pneg %p127
        %p205 = pneg %p124
        %s206 = sand.u32 %s114, 1
        %s207 = scalar_lea.sflag [#allocation5], %s206
        %s208 = sand.u32 %s114, 1
        %s209 = scalar_lea.vmem [#allocation4], %s208
        %s210 = smul.u32 2, %s22
        %p211 = scmp.lt.s32.totalorder %s21, 1
        %s212 = scalar_select %p211, %s21, 1
        %p213 = scmp.lt.s32.totalorder %s210, 1
        %s214 = scalar_select %p213, %s210, 1
        %s215 = smul.addr %s212, 6
        %s216 = sadd.s32 %s214, %s215
        %s217 = smul.addr %s216, 8
        %s218 = scalar_lea.vmem %s0, %s217
        %s219 = smul.u32 2, %s22
        %s220 = smul.u32 2, %s22
        %p221 = scmp.lt.s32.totalorder %s21, 1
        %s222 = scalar_select %p221, %s21, 1
        %p223 = scmp.lt.s32.totalorder %s220, 1
        %s224 = scalar_select %p223, %s220, 1
        %s225 = smul.addr %s222, 2
        %s226 = sadd.s32 %s224, %s225
        %s227 = scalar_lea.vmem %s1, %s226
        %s228 = smul.u32 2, %s22
        %p229 = scmp.eq.s32.totalorder %s22, 0
        // Predicated region
        $region33: #{tpu_custom_call.1} parent=31 // pred_check
          %p230 = pneg %p229
        $region34: #{tpu_custom_call.1} parent=31 // pred_check_branch
          %232 = sbr.rel (%p230) target = $region36
        $region35: #{tpu_custom_call.1} parent=31 // pred_region
          %v233 = vlaneseq
          %vm234 = vcmp.ge.s32.totalorder %v233, 0
          %vm235 = vcmp.lt.s32.totalorder %v233, 256
          %vm236 = vmand %vm234, %vm235
          %237 = vst.msk [vmem:[#allocation2] sm:$0x3] %vm236, 0.0
          %238 = vst.msk [vmem:[#allocation3] sm:$0x3] %vm236, 0.0
        $region36: #{tpu_custom_call.1} parent=31 // pred_fallthru
          _
        %v239 = vld [vmem:[%s218] sm:$0xff]
        %v240 = vld [vmem:[%s218 + $0x8] sm:$0xff]
        %v241 = vld [vmem:[%s218 + $0x10] sm:$0xff]
        %v242 = vld [vmem:[%s218 + $0x18] sm:$0xff]
        %v243 = vld [vmem:[%s218 + $0x20] sm:$0x7]
        %v244 = vld [vmem:[%s218 + $0x28] sm:$0x7]
        %v245 = vld [vmem:[%s227] sm:$0x3]
        %v246 = vld [vmem:[%s2] sm:$0xff]
        %v247 = vld [vmem:[%s2 + $0x8] sm:$0xff]
        %v248 = vld [vmem:[%s2 + $0x10] sm:$0x7]
        %vm249 = vcmask 1042432
        %v250 = vsel %vm249, %v243, -inf
        %v251 = vmax.f32 %v239, %v250
        %v252 = vmax.f32 %v251, %v241
        %v253 = vrot.slane %v252, 4
        %v254 = vmax.f32 %v252, %v253
        %v255 = vrot.slane %v254, 2
        %v256 = vmax.f32 %v254, %v255
        %v257 = vrot.slane %v256, 1
        %v258 = vmax.f32 %v256, %v257
        %v259 = vsel %vm249, %v244, -inf
        %v260 = vmax.f32 %v240, %v259
        %v261 = vmax.f32 %v260, %v242
        %v262 = vrot.slane %v261, 4
        %v263 = vmax.f32 %v261, %v262
        %v264 = vrot.slane %v263, 2
        %v265 = vmax.f32 %v263, %v264
        %v266 = vrot.slane %v265, 1
        %v267 = vmax.f32 %v265, %v266
        %v268 = vsub.f32 %v239, %v258
        %v269 = vsub.f32 %v240, %v267
        %v270 = vsub.f32 %v241, %v258
        %v271 = vsub.f32 %v242, %v267
        %v272 = vsub.f32 %v243, %v258
        %v273 = vsub.f32 %v244, %v267
        %v274 = vmul.f32 %v268, 1.442695
        %v275 = vpow.pop %v274
        %v276 = vmul.f32 %v269, 1.442695
        %v277 = vpow.pop %v276
        %v278 = vmul.f32 %v270, 1.442695
        %v279 = vpow.pop %v278
        %v280 = vmul.f32 %v271, 1.442695
        %v281 = vpow.pop %v280
        %v282 = vmul.f32 %v272, 1.442695
        %v283 = vpow.pop %v282
        %v284 = vmul.f32 %v273, 1.442695
        %v285 = vpow.pop %v284
        %v286 = vadd.f32 %v275, %v279
        %v287 = vsel %vm249, %v283, 0.0
        %v288 = vadd.f32 %v286, %v287
        %v289 = vrot.slane %v288, 4
        %v290 = vadd.f32 %v288, %v289
        %v291 = vrot.slane %v290, 2
        %v292 = vadd.f32 %v290, %v291
        %v293 = vrot.slane %v292, 1
        %v294 = vadd.f32 %v292, %v293
        %v295 = vadd.f32 %v277, %v281
        %v296 = vsel %vm249, %v285, 0.0
        %v297 = vadd.f32 %v295, %v296
        %v298 = vrot.slane %v297, 4
        %v299 = vadd.f32 %v297, %v298
        %v300 = vrot.slane %v299, 2
        %v301 = vadd.f32 %v299, %v300
        %v302 = vrot.slane %v301, 1
        %v303 = vadd.f32 %v301, %v302
        %v304 = vlog2.pop %v294
        %v305 = vmul.f32 %v304, 0.6931472
        %v306 = vlog2.pop %v303
        %v307 = vmul.f32 %v306, 0.6931472
        %v308 = vlaneseq
        %v309 = vshrl.u32 %v308, 7
        %v310 = vadd.s32 %v309, 8
        %v311 = vadd.s32 %v309, 16
        %v312 = vlaneseq
        %v313 = vshrl.u32 %v312, 7
        %v314 = vsub.s32 0, %v313
        %v315 = vrot.slane %v245, %v314
        %v316 = vlaneseq
        %v317 = vshrl.u32 %v316, 7
        %v318 = vsub.s32 1, %v317
        %v319 = vrot.slane %v245, %v318
        %vm320 = vcmp.eq.s32.totalorder %v309, %v315
        %vm321 = vcmp.eq.s32.totalorder %v309, %v319
        %vm322 = vcmp.eq.s32.totalorder %v310, %v315
        %vm323 = vcmp.eq.s32.totalorder %v310, %v319
        %vm324 = vcmp.eq.s32.totalorder %v311, %v315
        %vm325 = vcmp.eq.s32.totalorder %v311, %v319
        %v326 = vsel %vm320, %v268, 0.0
        %v327 = vsel %vm321, %v269, 0.0
        %v328 = vsel %vm322, %v270, 0.0
        %v329 = vsel %vm323, %v271, 0.0
        %v330 = vsel %vm324, %v272, 0.0
        %v331 = vsel %vm325, %v273, 0.0
        %v332 = vadd.f32 %v326, %v328
        %v333 = vsel %vm249, %v330, 0.0
        %v334 = vadd.f32 %v332, %v333
        %v335 = vrot.slane %v334, 4
        %v336 = vadd.f32 %v334, %v335
        %v337 = vrot.slane %v336, 2
        %v338 = vadd.f32 %v336, %v337
        %v339 = vrot.slane %v338, 1
        %v340 = vadd.f32 %v338, %v339
        %v341 = vadd.f32 %v327, %v329
        %v342 = vsel %vm249, %v331, 0.0
        %v343 = vadd.f32 %v341, %v342
        %v344 = vrot.slane %v343, 4
        %v345 = vadd.f32 %v343, %v344
        %v346 = vrot.slane %v345, 2
        %v347 = vadd.f32 %v345, %v346
        %v348 = vrot.slane %v347, 1
        %v349 = vadd.f32 %v347, %v348
        %351 = vset.pattern.permute.xlu0 0
        %352 = vperm.xlu0 %351, %v246
        %v353 = vpop.permute.xlu0 %352
        %356 = vset.pattern.permute.xlu0 0
        %357 = vperm.xlu0 %356, %v247
        %v358 = vpop.permute.xlu0 %357
        %361 = vset.pattern.permute.xlu0 0
        %362 = vperm.xlu0 %361, %v248
        %v363 = vpop.permute.xlu0 %362
        %v365 = vsel %vm320, %v353, 0.0
        %v366 = vsel %vm321, %v353, 0.0
        %v367 = vsel %vm322, %v358, 0.0
        %v368 = vsel %vm323, %v358, 0.0
        %v369 = vsel %vm324, %v363, 0.0
        %v370 = vsel %vm325, %v363, 0.0
        %v371 = vadd.f32 %v365, %v367
        %v372 = vsel %vm249, %v369, 0.0
        %v373 = vadd.f32 %v371, %v372
        %v374 = vrot.slane %v373, 4
        %v375 = vadd.f32 %v373, %v374
        %v376 = vrot.slane %v375, 2
        %v377 = vadd.f32 %v375, %v376
        %v378 = vrot.slane %v377, 1
        %v379 = vadd.f32 %v377, %v378
        %v380 = vadd.f32 %v366, %v368
        %v381 = vsel %vm249, %v370, 0.0
        %v382 = vadd.f32 %v380, %v381
        %v383 = vrot.slane %v382, 4
        %v384 = vadd.f32 %v382, %v383
        %v385 = vrot.slane %v384, 2
        %v386 = vadd.f32 %v384, %v385
        %v387 = vrot.slane %v386, 1
        %v388 = vadd.f32 %v386, %v387
        %v389 = vsub.f32 %v340, %v305
        %v390 = vsub.f32 %v349, %v307
        %vm391 = vcmp.ne.s32.totalorder %v245, 21
        %vm392 = vcmp.le.f32.partialorder %v389, -0.51082563
        %vm393 = vcmp.le.f32.partialorder %v390, -0.51082563
        %v394 = vsel %vm392, 1, 0
        %v395 = vsel %vm393, 1, 0
        %v396 = vcombine.low %v394, %v395
        %v398 = vunpack.c.l.s4 1966171168
        %v399 = vunpack.c.0.s8 %v398
        %v400 = vlaneseq
        %v401 = vshrl.u32 %v400, 7
        %v402 = vsub.s32 %v399, %v401
        %v403 = vrot.slane %v396, %v402
        %v405 = vunpack.c.l.s4 1966171168
        %v406 = vunpack.c.0.s8 %v405
        %v407 = vlaneseq
        %v408 = vshrl.u32 %v407, 7
        %v409 = vsub.s32 %v406, %v408
        %v410 = vrot.slane %v403, %v409
        %vm411 = vcmp.ne.s32.totalorder %v410, 0
        %vm412 = vmand %vm391, %vm411
        %v413 = vld [vmem:[#allocation2] sm:$0x3]
        %v414 = vsub.f32 0.0, %v379
        %v415 = vsub.f32 0.0, %v388
        %v416 = vmul.f32 %v414, %v389
        %v417 = vmul.f32 %v415, %v390
        %v420 = vcombine.low %v416, %v417
        %v422 = vunpack.c.l.s4 1966171168
        %v423 = vunpack.c.0.s8 %v422
        %v424 = vlaneseq
        %v425 = vshrl.u32 %v424, 7
        %v426 = vsub.s32 %v423, %v425
        %v427 = vrot.slane %v420, %v426
        %v429 = vunpack.c.l.s4 1966171168
        %v430 = vunpack.c.0.s8 %v429
        %v431 = vlaneseq
        %v432 = vshrl.u32 %v431, 7
        %v433 = vsub.s32 %v430, %v432
        %v434 = vrot.slane %v427, %v433
        %v436 = vsel %vm412, %v434, 0.0
        %v437 = vadd.f32 %v413, %v436
        %v438 = vlaneseq
        %vm439 = vcmp.ge.s32.totalorder %v438, 0
        %vm440 = vcmp.lt.s32.totalorder %v438, 256
        %vm441 = vmand %vm439, %vm440
        %442 = vst.msk [vmem:[#allocation2] sm:$0x3] %vm441, %v437
        %v443 = vld [vmem:[#allocation3] sm:$0x3]
        %v446 = vcombine.low %v379, %v388
        %v448 = vunpack.c.l.s4 1966171168
        %v449 = vunpack.c.0.s8 %v448
        %v450 = vlaneseq
        %v451 = vshrl.u32 %v450, 7
        %v452 = vsub.s32 %v449, %v451
        %v453 = vrot.slane %v446, %v452
        %v455 = vunpack.c.l.s4 1966171168
        %v456 = vunpack.c.0.s8 %v455
        %v457 = vlaneseq
        %v458 = vshrl.u32 %v457, 7
        %v459 = vsub.s32 %v456, %v458
        %v460 = vrot.slane %v453, %v459
        %v462 = vsel %vm412, %v460, 0.0
        %v463 = vadd.f32 %v443, %v462
        %464 = vst.msk [vmem:[#allocation3] sm:$0x3] %vm441, %v463
        // Predicated region
        $region37: #{tpu_custom_call.1} parent=31 // pred_check
          %p465 = pneg %p229
        $region38: #{tpu_custom_call.1} parent=31 // pred_check_branch
          %467 = sbr.rel (%p465) target = $region40
        $region39: #{tpu_custom_call.1} parent=31 // pred_region
          %v468 = vld [vmem:[#allocation2] sm:$0x3]
          %v470 = vlaneseq
          %v471 = vshrl.u32 %v470, 7
          %v472 = vsub.s32 0, %v471
          %v473 = vrot.slane %v468, %v472
          %v474 = vlaneseq
          %v475 = vshrl.u32 %v474, 7
          %v476 = vsub.s32 1, %v475
          %v477 = vrot.slane %v468, %v476
          %vm480 = vcmask 1040384
          %v481 = vsel %vm480, %v473, 0.0
          %v482 = vsel %vm480, %v477, 0.0
          %v483 = vadd.f32 %v481, %v482
          %484 = vadd.xlane.f32.xlu0 %v483
          %v485 = vpop.xlane.xlu0 %484
          %v486 = vld [vmem:[#allocation3] sm:$0x3]
          %v488 = vlaneseq
          %v489 = vshrl.u32 %v488, 7
          %v490 = vsub.s32 0, %v489
          %v491 = vrot.slane %v486, %v490
          %v492 = vlaneseq
          %v493 = vshrl.u32 %v492, 7
          %v494 = vsub.s32 1, %v493
          %v495 = vrot.slane %v486, %v494
          %v498 = vsel %vm480, %v491, 0.0
          %v499 = vsel %vm480, %v495, 0.0
          %v500 = vadd.f32 %v498, %v499
          %501 = vadd.xlane.f32.xlu0 %v500
          %v502 = vpop.xlane.xlu0 %501
          %v503 = vlaneseq
          %v504 = vand.u32 %v503, 127
          %vm505 = vcmp.eq.s32.totalorder %v504, 0
          %vm506 = vcmp.eq.s32.totalorder %v504, 1
          %v507 = vsel %vm506, %v502, 0.0
          %v508 = vsel %vm505, %v485, %v507
          %509 = vst [vmem:[%s209] sm:$0x1] %v508
        $region40: #{tpu_custom_call.1} parent=31 // pred_fallthru
          _
        %s510 = sand.u32 %s114, 1
        %s511 = scalar_lea.sflag [#allocation5], %s510
        %s512 = sand.u32 %s114, 1
        %s513 = scalar_lea.vmem [#allocation4], %s512
        // Predicated region
        $region41: #{tpu_custom_call.1} parent=31 // pred_check
          %p514 = pneg %p124
        $region42: #{tpu_custom_call.1} parent=31 // pred_check_branch
          %516 = sbr.rel (%p514) target = $region44
        $region43: #{tpu_custom_call.1} parent=31 // pred_region
          %s518 = ssub.s32 16, 16
          %519 = vsyncadd %s511, %s518
          %s520 = smul.addr %s21, 16
          %s521 = scalar_lea.hbm %s3, %s520
          %s523 = sshll.u32 %s513, 4
          %s524 = int_to_ptr.vmem [resolvable:$true] %s523
          %526 = dma.vmem_to_hbm [thread:$0]  %s524, 16, %s521, %s511
        $region44: #{tpu_custom_call.1} parent=31 // pred_fallthru
          _
      $region32: #{tpu_custom_call.1} parent=5 // pred_fallthru
        _
      %p527 = scmp.le.s32.totalorder 2, %s12
      // Predicated region
      $region45: #{tpu_custom_call.1} parent=5 // pred_check
        %p528 = pneg %p527
      $region46: #{tpu_custom_call.1} parent=5 // pred_check_branch
        %530 = sbr.rel (%p528) target = $region48
      $region47: #{tpu_custom_call.1} parent=5 // pred_region
        %s531 = ssub.s32 %s12, 2
        // Predicated region
        $region49: #{tpu_custom_call.1} parent=47 // pred_check
          %p532 = pneg %p130
        $region50: #{tpu_custom_call.1} parent=47 // pred_check_branch
          %534 = sbr.rel (%p532) target = $region52
        $region51: #{tpu_custom_call.1} parent=47 // pred_region
          %s535 = sand.u32 %s115, 1
          %s536 = scalar_lea.sflag [#allocation5], %s535
          %s537 = sand.u32 %s115, 1
          %s538 = scalar_lea.vmem [#allocation4], %s537
          %539 = dma.done %s536, 16
        $region52: #{tpu_custom_call.1} parent=47 // pred_fallthru
          _
      $region48: #{tpu_custom_call.1} parent=5 // pred_fallthru
        _
    $region6: #{tpu_custom_call.1} parent=1 // loop_footer
      %s16 = sadd.s32 1, %s12
    $region7: #{tpu_custom_call.1} parent=1 // loop_footer_branch
      %11 = sbr.rel target = $region3
    $region8: #{tpu_custom_call.1} parent=1 // loop_exit
      _
    %540 = vsyncpa [#allocation5], 1
    %s541 = scalar_lea.sflag [#allocation5], 1
    %542 = vsyncpa %s541, 1

</llo_original>
